<compile_context>
chip_gen: v6e
topology: v6e:2x2x1
jax: 0.10.0
libtpu: 0.0.40
codegen_flags: <defaults>
</compile_context>

<pallas_src>
import functools

import jax
import jax.numpy as jnp
from jax import lax
from jax.experimental import pallas as pl
from jax.experimental.pallas import tpu as pltpu


def _round_up(x, m):
    return (x + m - 1) // m * m


def _convlstm_kernel(x_ref, h_ref, c_ref, w_ref, b_ref,
                     h_out_ref, c_out_ref, patch_ref,
                     *, H, W, kh, kw, hid, cxp):
    """One batch element per grid step.

    x_ref:  (1, cxp, HW + 2*pad)   x channels (zero-padded to cxp), lane-padded
    h_ref:  (1, hid, HW + 2*pad)   current hidden state, lane-padded
    c_ref:  (1, hid, HW)           current cell state
    w_ref:  (4*hid, kh*kw*(cxp+hid))  fused conv weight
    b_ref:  (4*hid, 1)             conv bias (broadcast along lanes)
    h_out_ref, c_out_ref: (1, hid, HW)
    patch_ref: VMEM scratch (kh*kw*(cxp+hid), HW), f32
    """
    HW = H * W
    ph, pw = kh // 2, kw // 2
    cblk = cxp + hid                       # patch rows contributed per tap

    xz = x_ref[0]                          # (cxp, HW + 2*(ph*W+pw))
    hz = h_ref[0]                          # (hid, HW + 2*(ph*W+pw))

    # Column-validity masks (zero 'same' padding in the x direction).  Row
    # overflow is handled by the flat lane padding: out-of-range row reads
    # land either in the zero pad or on column-masked positions.
    pos = lax.broadcasted_iota(jnp.int32, (1, HW), 1)
    col = pos % W
    col_mask = {dx: (col + dx >= 0) & (col + dx < W)
                for dx in range(-pw, pw + 1) if dx != 0}

    # Assemble the (kh*kw*cblk, HW) patch slab.  Row offsets are static
    # multiples of cblk (cblk % 8 == 0) -> aligned sublane stores, and the
    # shifted views are static lane slices -> no (H,W)-collapsing reshapes.
    for ky in range(kh):
        for kx in range(kw):
            off = ky * W + kx              # flat shift of this tap
            dx = kx - pw
            xs = xz[:, off:off + HW]
            hs = hz[:, off:off + HW]
            if dx != 0:
                m = col_mask[dx]
                xs = jnp.where(m, xs, 0.0)
                hs = jnp.where(m, hs, 0.0)
            t = ky * kw + kx
            patch_ref[t * cblk:t * cblk + cxp, :] = xs
            patch_ref[t * cblk + cxp:(t + 1) * cblk, :] = hs

    # One fused MXU matmul for all taps and all four gates (f32 accumulate).
    acc = jnp.dot(w_ref[...], patch_ref[...].astype(w_ref.dtype),
                  preferred_element_type=jnp.float32)      # (4*hid, HW)
    acc = acc + b_ref[...]                                  # + (4*hid, 1)

    # Gate order matches torch.split(combined_conv, hidden_dim, dim=1):
    # i, f, o, g.  Row slices are sublane-aligned when hid % 8 == 0.
    cc_i = acc[0 * hid:1 * hid]
    cc_f = acc[1 * hid:2 * hid]
    cc_o = acc[2 * hid:3 * hid]
    cc_g = acc[3 * hid:4 * hid]

    i = jax.nn.sigmoid(cc_i)
    f = jax.nn.sigmoid(cc_f)
    o = jax.nn.sigmoid(cc_o)
    g = jnp.tanh(cc_g)

    c_cur = c_ref[0].astype(jnp.float32)   # (hid, HW)
    c_next = f * c_cur + i * g
    h_next = o * jnp.tanh(c_next)

    h_out_ref[0] = h_next.astype(h_out_ref.dtype)
    c_out_ref[0] = c_next.astype(c_out_ref.dtype)


def conv_lstm_cell(x_nchw, h_nchw, c_nchw, weight_oihw, bias, kernel_size,
                   *, matmul_dtype=jnp.float32):
    """Pallas ConvLSTMCell forward.  PyTorch NCHW / OIHW layouts in and out.

    matmul_dtype=jnp.bfloat16 uses bf16 MXU inputs (f32 accumulation) —
    recommended on v6e/v7x; default f32 keeps tight numerics everywhere.
    """
    kh, kw = kernel_size
    assert kh % 2 == 1 and kw % 2 == 1, (
        "odd kernel sizes only (true 'same' padding, as in the PyTorch module)")
    ph, pw = kh // 2, kw // 2

    B, Cx, H, W = x_nchw.shape
    hid = h_nchw.shape[1]
    HW = H * W
    cxp = _round_up(Cx, 8)        # pad x channels so patch rows stay 8-aligned
    cblk = cxp + hid
    K = kh * kw * cblk
    pad_flat = ph * W + pw        # flat lane pad covering row over/underflow
    HWp = HW + 2 * pad_flat

    # --- wrapper glue: pure reshapes + tiny 1-D zero pads only ---
    xz = jnp.pad(x_nchw.reshape(B, Cx, HW).astype(jnp.float32),
                 ((0, 0), (0, cxp - Cx), (pad_flat, pad_flat)))
    hz = jnp.pad(h_nchw.reshape(B, hid, HW).astype(jnp.float32),
                 ((0, 0), (0, 0), (pad_flat, pad_flat)))
    c_flat = c_nchw.reshape(B, hid, HW)

    # Conv weight (4*hid, Cx+hid, kh, kw) -> (4*hid, K), columns ordered
    # tap-major, within a tap: [x channels padded to cxp, h channels], to
    # match the in-kernel patch layout.  combined = cat([x, h], dim=1).
    w_x = jnp.pad(weight_oihw[:, :Cx], ((0, 0), (0, cxp - Cx), (0, 0), (0, 0)))
    w_h = weight_oihw[:, Cx:]
    w_full = jnp.concatenate([w_x, w_h], axis=1)           # (4*hid, cblk, kh, kw)
    w_mat = jnp.transpose(w_full, (2, 3, 1, 0)).reshape(K, 4 * hid).T
    w_mat = w_mat.astype(matmul_dtype)                      # (4*hid, K)
    bias2d = bias.reshape(4 * hid, 1).astype(jnp.float32)

    kernel = functools.partial(_convlstm_kernel, H=H, W=W, kh=kh, kw=kw,
                               hid=hid, cxp=cxp)

    # TODO(synk): for large images (v7x's 64 MiB VMEM) add an H-strip grid axis
    # with kh-1 halo rows instead of one whole image per grid step.
    h_next, c_next = pl.pallas_call(
        kernel,
        out_shape=(jax.ShapeDtypeStruct((B, hid, HW), x_nchw.dtype),
                   jax.ShapeDtypeStruct((B, hid, HW), x_nchw.dtype)),
        grid_spec=pltpu.PrefetchScalarGridSpec(
            num_scalar_prefetch=0,
            grid=(B,),
            in_specs=[
                pl.BlockSpec((1, cxp, HWp), lambda b: (b, 0, 0)),
                pl.BlockSpec((1, hid, HWp), lambda b: (b, 0, 0)),
                pl.BlockSpec((1, hid, HW), lambda b: (b, 0, 0)),
                pl.BlockSpec((4 * hid, K), lambda b: (0, 0)),
                pl.BlockSpec((4 * hid, 1), lambda b: (0, 0)),
            ],
            out_specs=[
                pl.BlockSpec((1, hid, HW), lambda b: (b, 0, 0)),
                pl.BlockSpec((1, hid, HW), lambda b: (b, 0, 0)),
            ],
            scratch_shapes=[pltpu.VMEM((K, HW), jnp.float32)],
        ),
        compiler_params=pltpu.CompilerParams(
            dimension_semantics=("parallel",)),
    )(xz, hz, c_flat, w_mat, bias2d)

    # lane-dense outputs -> back to NCHW via free reshape
    return (h_next.reshape(B, hid, H, W), c_next.reshape(B, hid, H, W))


def _reference(x_nchw, h_nchw, c_nchw, weight_oihw, bias, kernel_size):
    """Pure-JAX reference of the PyTorch forward (NCHW throughout)."""
    combined = jnp.concatenate([x_nchw, h_nchw], axis=1)
    out = lax.conv_general_dilated(
        combined, weight_oihw,
        window_strides=(1, 1),
        padding=[(kernel_size[0] // 2,) * 2, (kernel_size[1] // 2,) * 2],
        dimension_numbers=("NCHW", "OIHW", "NCHW"))
    out = out + bias[None, :, None, None]
    cc_i, cc_f, cc_o, cc_g = jnp.split(out, 4, axis=1)
    i = jax.nn.sigmoid(cc_i)
    f = jax.nn.sigmoid(cc_f)
    o = jax.nn.sigmoid(cc_o)
    g = jnp.tanh(cc_g)
    c_next = f * c_nchw + i * g
    h_next = o * jnp.tanh(c_next)
    return h_next, c_next


if __name__ == "__main__":
    # small deterministic config
    B, input_dim, hidden_dim, H, W = 2, 4, 8, 16, 16
    kernel_size = (3, 3)
    Cin = input_dim + hidden_dim

    key = jax.random.PRNGKey(0)
    kx_, kh_, kc_, kw_, kb_ = jax.random.split(key, 5)

    x = jax.random.normal(kx_, (B, input_dim, H, W), jnp.float32)
    h_cur = jax.random.normal(kh_, (B, hidden_dim, H, W), jnp.float32)
    c_cur = jax.random.normal(kc_, (B, hidden_dim, H, W), jnp.float32)

    # nn.Conv2d(in=Cin, out=4*hidden, kernel=3x3, bias=True) parameter shapes
    weight = 0.1 * jax.random.normal(
        kw_, (4 * hidden_dim, Cin, kernel_size[0], kernel_size[1]), jnp.float32)
    bias = 0.1 * jax.random.normal(kb_, (4 * hidden_dim,), jnp.float32)

    h_expected, c_expected = _reference(x, h_cur, c_cur, weight, bias, kernel_size)

    # f32 MXU path (all generations)
    h_next, c_next = conv_lstm_cell(x, h_cur, c_cur, weight, bias, kernel_size)
    jax.block_until_ready((h_next, c_next))
    assert jnp.allclose(h_next, h_expected, atol=1e-4, rtol=1e-4)
    assert jnp.allclose(c_next, c_expected, atol=1e-4, rtol=1e-4)

    # bf16 MXU-input path (v6e/v7x native); f32 accumulation, looser tolerance.
    h_bf, c_bf = conv_lstm_cell(x, h_cur, c_cur, weight, bias, kernel_size,
                                matmul_dtype=jnp.bfloat16)
    jax.block_until_ready((h_bf, c_bf))
    assert jnp.allclose(h_bf, h_expected, atol=1e-1, rtol=1e-1)
    assert jnp.allclose(c_bf, c_expected, atol=1e-1, rtol=1e-1)

    print("KERNEL_OK")
</pallas_src>

<mosaic_0001>
module attributes {stable_mosaic.version = 11 : i64} {
  func.func @_convlstm_kernel(%arg0: i32, %arg1: memref<1x8x290xf32, #tpu.memory_space<vmem>>, %arg2: memref<1x8x290xf32, #tpu.memory_space<vmem>>, %arg3: memref<1x8x256xf32, #tpu.memory_space<vmem>>, %arg4: memref<32x144xf32, #tpu.memory_space<vmem>>, %arg5: memref<32x1xf32, #tpu.memory_space<vmem>>, %arg6: memref<1x8x256xf32, #tpu.memory_space<vmem>>, %arg7: memref<1x8x256xf32, #tpu.memory_space<vmem>>, %arg8: memref<144x256xf32, #tpu.memory_space<vmem>>) attributes {dimension_semantics = [#tpu.dimension_semantics<parallel>], iteration_bounds = array<i64: 2>, scalar_prefetch = 0 : i64, scratch_operands = 1 : i64, tpu.core_type = #tpu.core_type<tc>, window_params = [{transform_indices = @transform_0, window_bounds = array<i64: 1, 8, 290>}, {transform_indices = @transform_1, window_bounds = array<i64: 1, 8, 290>}, {transform_indices = @transform_2, window_bounds = array<i64: 1, 8, 256>}, {pipeline_mode = #tpu.pipeline_mode<synchronous>, transform_indices = @transform_3, window_bounds = array<i64: 32, 144>}, {pipeline_mode = #tpu.pipeline_mode<synchronous>, transform_indices = @transform_4, window_bounds = array<i64: 32, 1>}, {transform_indices = @transform_5, window_bounds = array<i64: 1, 8, 256>}, {transform_indices = @transform_6, window_bounds = array<i64: 1, 8, 256>}]} {
    %c0 = arith.constant 0 : index
    %c0_0 = arith.constant 0 : index
    %c0_1 = arith.constant 0 : index
    %0 = vector.load %arg1[%c0, %c0_0, %c0_1] : memref<1x8x290xf32, #tpu.memory_space<vmem>>, vector<1x8x290xf32>
    %1 = vector.shape_cast %0 : vector<1x8x290xf32> to vector<8x290xf32>
    %c0_2 = arith.constant 0 : index
    %c0_3 = arith.constant 0 : index
    %c0_4 = arith.constant 0 : index
    %2 = vector.load %arg2[%c0_2, %c0_3, %c0_4] : memref<1x8x290xf32, #tpu.memory_space<vmem>>, vector<1x8x290xf32>
    %3 = vector.shape_cast %2 : vector<1x8x290xf32> to vector<8x290xf32>
    %4 = tpu.iota {dimensions = array<i32: 1>} : vector<1x256xi32>
    %c16_i32 = arith.constant 16 : i32
    %c0_i32 = arith.constant 0 : i32
    %5 = arith.cmpi eq, %c16_i32, %c0_i32 : i32
    %c1_i32 = arith.constant 1 : i32
    %6 = arith.select %5, %c1_i32, %c16_i32 : i32
    %7 = vector.broadcast %6 : i32 to vector<1x256xi32>
    %8 = arith.remsi %4, %7 : vector<1x256xi32>
    %c0_i32_5 = arith.constant 0 : i32
    %9 = vector.broadcast %c0_i32_5 : i32 to vector<1x256xi32>
    %10 = arith.cmpi ne, %8, %9 : vector<1x256xi32>
    %c0_i32_6 = arith.constant 0 : i32
    %11 = vector.broadcast %c0_i32_6 : i32 to vector<1x256xi32>
    %12 = arith.cmpi slt, %8, %11 : vector<1x256xi32>
    %c0_i32_7 = arith.constant 0 : i32
    %13 = arith.cmpi slt, %6, %c0_i32_7 : i32
    %14 = vector.broadcast %13 : i1 to vector<1x256xi1>
    %15 = vector.broadcast %14 : vector<1x256xi1> to vector<1x256xi1>
    %16 = arith.xori %12, %15 : vector<1x256xi1>
    %17 = arith.andi %16, %10 : vector<1x256xi1>
    %18 = vector.broadcast %6 : i32 to vector<1x256xi32>
    %19 = arith.addi %8, %18 : vector<1x256xi32>
    %20 = arith.select %17, %19, %8 : vector<1x256xi1>, vector<1x256xi32>
    %c-1_i32 = arith.constant -1 : i32
    %21 = vector.broadcast %c-1_i32 : i32 to vector<1x256xi32>
    %22 = arith.addi %20, %21 : vector<1x256xi32>
    %c0_i32_8 = arith.constant 0 : i32
    %23 = vector.broadcast %c0_i32_8 : i32 to vector<1x256xi32>
    %24 = arith.cmpi sge, %22, %23 : vector<1x256xi32>
    %c-1_i32_9 = arith.constant -1 : i32
    %25 = vector.broadcast %c-1_i32_9 : i32 to vector<1x256xi32>
    %26 = arith.addi %20, %25 : vector<1x256xi32>
    %c16_i32_10 = arith.constant 16 : i32
    %27 = vector.broadcast %c16_i32_10 : i32 to vector<1x256xi32>
    %28 = arith.cmpi slt, %26, %27 : vector<1x256xi32>
    %29 = arith.andi %24, %28 : vector<1x256xi1>
    %c1_i32_11 = arith.constant 1 : i32
    %30 = vector.broadcast %c1_i32_11 : i32 to vector<1x256xi32>
    %31 = arith.addi %20, %30 : vector<1x256xi32>
    %c0_i32_12 = arith.constant 0 : i32
    %32 = vector.broadcast %c0_i32_12 : i32 to vector<1x256xi32>
    %33 = arith.cmpi sge, %31, %32 : vector<1x256xi32>
    %c1_i32_13 = arith.constant 1 : i32
    %34 = vector.broadcast %c1_i32_13 : i32 to vector<1x256xi32>
    %35 = arith.addi %20, %34 : vector<1x256xi32>
    %c16_i32_14 = arith.constant 16 : i32
    %36 = vector.broadcast %c16_i32_14 : i32 to vector<1x256xi32>
    %37 = arith.cmpi slt, %35, %36 : vector<1x256xi32>
    %38 = arith.andi %33, %37 : vector<1x256xi1>
    %39 = vector.extract_strided_slice %1 {offsets = [0, 0], sizes = [8, 256], strides = [1, 1]} : vector<8x290xf32> to vector<8x256xf32>
    %40 = vector.extract_strided_slice %3 {offsets = [0, 0], sizes = [8, 256], strides = [1, 1]} : vector<8x290xf32> to vector<8x256xf32>
    %cst = arith.constant 0.000000e+00 : f32
    %41 = vector.shape_cast %29 : vector<1x256xi1> to vector<1x256xi1>
    %42 = vector.broadcast %41 : vector<1x256xi1> to vector<8x256xi1>
    %43 = vector.broadcast %cst : f32 to vector<8x256xf32>
    %44 = arith.select %42, %39, %43 : vector<8x256xi1>, vector<8x256xf32>
    %cst_15 = arith.constant 0.000000e+00 : f32
    %45 = vector.shape_cast %29 : vector<1x256xi1> to vector<1x256xi1>
    %46 = vector.broadcast %45 : vector<1x256xi1> to vector<8x256xi1>
    %47 = vector.broadcast %cst_15 : f32 to vector<8x256xf32>
    %48 = arith.select %46, %40, %47 : vector<8x256xi1>, vector<8x256xf32>
    %c0_16 = arith.constant 0 : index
    %c0_17 = arith.constant 0 : index
    %49 = vector.load %arg8[%c0_16, %c0_17] : memref<144x256xf32, #tpu.memory_space<vmem>>, vector<8x256xf32>
    tpu.vector_store %arg8[%c0_16, %c0_17], %44 {strides = array<i32>} : memref<144x256xf32, #tpu.memory_space<vmem>>, vector<8x256xf32>,
    %c8 = arith.constant 8 : index
    %c0_18 = arith.constant 0 : index
    %50 = vector.load %arg8[%c8, %c0_18] : memref<144x256xf32, #tpu.memory_space<vmem>>, vector<8x256xf32>
    tpu.vector_store %arg8[%c8, %c0_18], %48 {strides = array<i32>} : memref<144x256xf32, #tpu.memory_space<vmem>>, vector<8x256xf32>,
    %51 = vector.extract_strided_slice %1 {offsets = [0, 1], sizes = [8, 256], strides = [1, 1]} : vector<8x290xf32> to vector<8x256xf32>
    %52 = vector.extract_strided_slice %3 {offsets = [0, 1], sizes = [8, 256], strides = [1, 1]} : vector<8x290xf32> to vector<8x256xf32>
    %c16 = arith.constant 16 : index
    %c0_19 = arith.constant 0 : index
    %53 = vector.load %arg8[%c16, %c0_19] : memref<144x256xf32, #tpu.memory_space<vmem>>, vector<8x256xf32>
    tpu.vector_store %arg8[%c16, %c0_19], %51 {strides = array<i32>} : memref<144x256xf32, #tpu.memory_space<vmem>>, vector<8x256xf32>,
    %c24 = arith.constant 24 : index
    %c0_20 = arith.constant 0 : index
    %54 = vector.load %arg8[%c24, %c0_20] : memref<144x256xf32, #tpu.memory_space<vmem>>, vector<8x256xf32>
    tpu.vector_store %arg8[%c24, %c0_20], %52 {strides = array<i32>} : memref<144x256xf32, #tpu.memory_space<vmem>>, vector<8x256xf32>,
    %55 = vector.extract_strided_slice %1 {offsets = [0, 2], sizes = [8, 256], strides = [1, 1]} : vector<8x290xf32> to vector<8x256xf32>
    %56 = vector.extract_strided_slice %3 {offsets = [0, 2], sizes = [8, 256], strides = [1, 1]} : vector<8x290xf32> to vector<8x256xf32>
    %cst_21 = arith.constant 0.000000e+00 : f32
    %57 = vector.shape_cast %38 : vector<1x256xi1> to vector<1x256xi1>
    %58 = vector.broadcast %57 : vector<1x256xi1> to vector<8x256xi1>
    %59 = vector.broadcast %cst_21 : f32 to vector<8x256xf32>
    %60 = arith.select %58, %55, %59 : vector<8x256xi1>, vector<8x256xf32>
    %cst_22 = arith.constant 0.000000e+00 : f32
    %61 = vector.shape_cast %38 : vector<1x256xi1> to vector<1x256xi1>
    %62 = vector.broadcast %61 : vector<1x256xi1> to vector<8x256xi1>
    %63 = vector.broadcast %cst_22 : f32 to vector<8x256xf32>
    %64 = arith.select %62, %56, %63 : vector<8x256xi1>, vector<8x256xf32>
    %c32 = arith.constant 32 : index
    %c0_23 = arith.constant 0 : index
    %65 = vector.load %arg8[%c32, %c0_23] : memref<144x256xf32, #tpu.memory_space<vmem>>, vector<8x256xf32>
    tpu.vector_store %arg8[%c32, %c0_23], %60 {strides = array<i32>} : memref<144x256xf32, #tpu.memory_space<vmem>>, vector<8x256xf32>,
    %c40 = arith.constant 40 : index
    %c0_24 = arith.constant 0 : index
    %66 = vector.load %arg8[%c40, %c0_24] : memref<144x256xf32, #tpu.memory_space<vmem>>, vector<8x256xf32>
    tpu.vector_store %arg8[%c40, %c0_24], %64 {strides = array<i32>} : memref<144x256xf32, #tpu.memory_space<vmem>>, vector<8x256xf32>,
    %67 = vector.extract_strided_slice %1 {offsets = [0, 16], sizes = [8, 256], strides = [1, 1]} : vector<8x290xf32> to vector<8x256xf32>
    %68 = vector.extract_strided_slice %3 {offsets = [0, 16], sizes = [8, 256], strides = [1, 1]} : vector<8x290xf32> to vector<8x256xf32>
    %cst_25 = arith.constant 0.000000e+00 : f32
    %69 = vector.shape_cast %29 : vector<1x256xi1> to vector<1x256xi1>
    %70 = vector.broadcast %69 : vector<1x256xi1> to vector<8x256xi1>
    %71 = vector.broadcast %cst_25 : f32 to vector<8x256xf32>
    %72 = arith.select %70, %67, %71 : vector<8x256xi1>, vector<8x256xf32>
    %cst_26 = arith.constant 0.000000e+00 : f32
    %73 = vector.shape_cast %29 : vector<1x256xi1> to vector<1x256xi1>
    %74 = vector.broadcast %73 : vector<1x256xi1> to vector<8x256xi1>
    %75 = vector.broadcast %cst_26 : f32 to vector<8x256xf32>
    %76 = arith.select %74, %68, %75 : vector<8x256xi1>, vector<8x256xf32>
    %c48 = arith.constant 48 : index
    %c0_27 = arith.constant 0 : index
    %77 = vector.load %arg8[%c48, %c0_27] : memref<144x256xf32, #tpu.memory_space<vmem>>, vector<8x256xf32>
    tpu.vector_store %arg8[%c48, %c0_27], %72 {strides = array<i32>} : memref<144x256xf32, #tpu.memory_space<vmem>>, vector<8x256xf32>,
    %c56 = arith.constant 56 : index
    %c0_28 = arith.constant 0 : index
    %78 = vector.load %arg8[%c56, %c0_28] : memref<144x256xf32, #tpu.memory_space<vmem>>, vector<8x256xf32>
    tpu.vector_store %arg8[%c56, %c0_28], %76 {strides = array<i32>} : memref<144x256xf32, #tpu.memory_space<vmem>>, vector<8x256xf32>,
    %79 = vector.extract_strided_slice %1 {offsets = [0, 17], sizes = [8, 256], strides = [1, 1]} : vector<8x290xf32> to vector<8x256xf32>
    %80 = vector.extract_strided_slice %3 {offsets = [0, 17], sizes = [8, 256], strides = [1, 1]} : vector<8x290xf32> to vector<8x256xf32>
    %c64 = arith.constant 64 : index
    %c0_29 = arith.constant 0 : index
    %81 = vector.load %arg8[%c64, %c0_29] : memref<144x256xf32, #tpu.memory_space<vmem>>, vector<8x256xf32>
    tpu.vector_store %arg8[%c64, %c0_29], %79 {strides = array<i32>} : memref<144x256xf32, #tpu.memory_space<vmem>>, vector<8x256xf32>,
    %c72 = arith.constant 72 : index
    %c0_30 = arith.constant 0 : index
    %82 = vector.load %arg8[%c72, %c0_30] : memref<144x256xf32, #tpu.memory_space<vmem>>, vector<8x256xf32>
    tpu.vector_store %arg8[%c72, %c0_30], %80 {strides = array<i32>} : memref<144x256xf32, #tpu.memory_space<vmem>>, vector<8x256xf32>,
    %83 = vector.extract_strided_slice %1 {offsets = [0, 18], sizes = [8, 256], strides = [1, 1]} : vector<8x290xf32> to vector<8x256xf32>
    %84 = vector.extract_strided_slice %3 {offsets = [0, 18], sizes = [8, 256], strides = [1, 1]} : vector<8x290xf32> to vector<8x256xf32>
    %cst_31 = arith.constant 0.000000e+00 : f32
    %85 = vector.shape_cast %38 : vector<1x256xi1> to vector<1x256xi1>
    %86 = vector.broadcast %85 : vector<1x256xi1> to vector<8x256xi1>
    %87 = vector.broadcast %cst_31 : f32 to vector<8x256xf32>
    %88 = arith.select %86, %83, %87 : vector<8x256xi1>, vector<8x256xf32>
    %cst_32 = arith.constant 0.000000e+00 : f32
    %89 = vector.shape_cast %38 : vector<1x256xi1> to vector<1x256xi1>
    %90 = vector.broadcast %89 : vector<1x256xi1> to vector<8x256xi1>
    %91 = vector.broadcast %cst_32 : f32 to vector<8x256xf32>
    %92 = arith.select %90, %84, %91 : vector<8x256xi1>, vector<8x256xf32>
    %c80 = arith.constant 80 : index
    %c0_33 = arith.constant 0 : index
    %93 = vector.load %arg8[%c80, %c0_33] : memref<144x256xf32, #tpu.memory_space<vmem>>, vector<8x256xf32>
    tpu.vector_store %arg8[%c80, %c0_33], %88 {strides = array<i32>} : memref<144x256xf32, #tpu.memory_space<vmem>>, vector<8x256xf32>,
    %c88 = arith.constant 88 : index
    %c0_34 = arith.constant 0 : index
    %94 = vector.load %arg8[%c88, %c0_34] : memref<144x256xf32, #tpu.memory_space<vmem>>, vector<8x256xf32>
    tpu.vector_store %arg8[%c88, %c0_34], %92 {strides = array<i32>} : memref<144x256xf32, #tpu.memory_space<vmem>>, vector<8x256xf32>,
    %95 = vector.extract_strided_slice %1 {offsets = [0, 32], sizes = [8, 256], strides = [1, 1]} : vector<8x290xf32> to vector<8x256xf32>
    %96 = vector.extract_strided_slice %3 {offsets = [0, 32], sizes = [8, 256], strides = [1, 1]} : vector<8x290xf32> to vector<8x256xf32>
    %cst_35 = arith.constant 0.000000e+00 : f32
    %97 = vector.shape_cast %29 : vector<1x256xi1> to vector<1x256xi1>
    %98 = vector.broadcast %97 : vector<1x256xi1> to vector<8x256xi1>
    %99 = vector.broadcast %cst_35 : f32 to vector<8x256xf32>
    %100 = arith.select %98, %95, %99 : vector<8x256xi1>, vector<8x256xf32>
    %cst_36 = arith.constant 0.000000e+00 : f32
    %101 = vector.shape_cast %29 : vector<1x256xi1> to vector<1x256xi1>
    %102 = vector.broadcast %101 : vector<1x256xi1> to vector<8x256xi1>
    %103 = vector.broadcast %cst_36 : f32 to vector<8x256xf32>
    %104 = arith.select %102, %96, %103 : vector<8x256xi1>, vector<8x256xf32>
    %c96 = arith.constant 96 : index
    %c0_37 = arith.constant 0 : index
    %105 = vector.load %arg8[%c96, %c0_37] : memref<144x256xf32, #tpu.memory_space<vmem>>, vector<8x256xf32>
    tpu.vector_store %arg8[%c96, %c0_37], %100 {strides = array<i32>} : memref<144x256xf32, #tpu.memory_space<vmem>>, vector<8x256xf32>,
    %c104 = arith.constant 104 : index
    %c0_38 = arith.constant 0 : index
    %106 = vector.load %arg8[%c104, %c0_38] : memref<144x256xf32, #tpu.memory_space<vmem>>, vector<8x256xf32>
    tpu.vector_store %arg8[%c104, %c0_38], %104 {strides = array<i32>} : memref<144x256xf32, #tpu.memory_space<vmem>>, vector<8x256xf32>,
    %107 = vector.extract_strided_slice %1 {offsets = [0, 33], sizes = [8, 256], strides = [1, 1]} : vector<8x290xf32> to vector<8x256xf32>
    %108 = vector.extract_strided_slice %3 {offsets = [0, 33], sizes = [8, 256], strides = [1, 1]} : vector<8x290xf32> to vector<8x256xf32>
    %c112 = arith.constant 112 : index
    %c0_39 = arith.constant 0 : index
    %109 = vector.load %arg8[%c112, %c0_39] : memref<144x256xf32, #tpu.memory_space<vmem>>, vector<8x256xf32>
    tpu.vector_store %arg8[%c112, %c0_39], %107 {strides = array<i32>} : memref<144x256xf32, #tpu.memory_space<vmem>>, vector<8x256xf32>,
    %c120 = arith.constant 120 : index
    %c0_40 = arith.constant 0 : index
    %110 = vector.load %arg8[%c120, %c0_40] : memref<144x256xf32, #tpu.memory_space<vmem>>, vector<8x256xf32>
    tpu.vector_store %arg8[%c120, %c0_40], %108 {strides = array<i32>} : memref<144x256xf32, #tpu.memory_space<vmem>>, vector<8x256xf32>,
    %111 = vector.extract_strided_slice %1 {offsets = [0, 34], sizes = [8, 256], strides = [1, 1]} : vector<8x290xf32> to vector<8x256xf32>
    %112 = vector.extract_strided_slice %3 {offsets = [0, 34], sizes = [8, 256], strides = [1, 1]} : vector<8x290xf32> to vector<8x256xf32>
    %cst_41 = arith.constant 0.000000e+00 : f32
    %113 = vector.shape_cast %38 : vector<1x256xi1> to vector<1x256xi1>
    %114 = vector.broadcast %113 : vector<1x256xi1> to vector<8x256xi1>
    %115 = vector.broadcast %cst_41 : f32 to vector<8x256xf32>
    %116 = arith.select %114, %111, %115 : vector<8x256xi1>, vector<8x256xf32>
    %cst_42 = arith.constant 0.000000e+00 : f32
    %117 = vector.shape_cast %38 : vector<1x256xi1> to vector<1x256xi1>
    %118 = vector.broadcast %117 : vector<1x256xi1> to vector<8x256xi1>
    %119 = vector.broadcast %cst_42 : f32 to vector<8x256xf32>
    %120 = arith.select %118, %112, %119 : vector<8x256xi1>, vector<8x256xf32>
    %c128 = arith.constant 128 : index
    %c0_43 = arith.constant 0 : index
    %121 = vector.load %arg8[%c128, %c0_43] : memref<144x256xf32, #tpu.memory_space<vmem>>, vector<8x256xf32>
    tpu.vector_store %arg8[%c128, %c0_43], %116 {strides = array<i32>} : memref<144x256xf32, #tpu.memory_space<vmem>>, vector<8x256xf32>,
    %c136 = arith.constant 136 : index
    %c0_44 = arith.constant 0 : index
    %122 = vector.load %arg8[%c136, %c0_44] : memref<144x256xf32, #tpu.memory_space<vmem>>, vector<8x256xf32>
    tpu.vector_store %arg8[%c136, %c0_44], %120 {strides = array<i32>} : memref<144x256xf32, #tpu.memory_space<vmem>>, vector<8x256xf32>,
    %c0_45 = arith.constant 0 : index
    %c0_46 = arith.constant 0 : index
    %123 = vector.load %arg4[%c0_45, %c0_46] : memref<32x144xf32, #tpu.memory_space<vmem>>, vector<32x144xf32>
    %c0_47 = arith.constant 0 : index
    %c0_48 = arith.constant 0 : index
    %124 = vector.load %arg8[%c0_47, %c0_48] : memref<144x256xf32, #tpu.memory_space<vmem>>, vector<144x256xf32>
    %cst_49 = arith.constant dense<0.000000e+00> : vector<32x256xf32>
    %125 = tpu.matmul %123, %124, %cst_49 {dimension_numbers = #tpu.dot_dimension_numbers<[1], [0], [0], [1], [0, 0, 1, 1], [], []>} : vector<32x144xf32>, vector<144x256xf32>, vector<32x256xf32> -> vector<32x256xf32>
    %c0_50 = arith.constant 0 : index
    %c0_51 = arith.constant 0 : index
    %126 = vector.load %arg5[%c0_50, %c0_51] : memref<32x1xf32, #tpu.memory_space<vmem>>, vector<32x1xf32>
    %127 = vector.broadcast %126 : vector<32x1xf32> to vector<32x256xf32>
    %128 = arith.addf %125, %127 : vector<32x256xf32>
    %129 = vector.extract_strided_slice %128 {offsets = [0, 0], sizes = [8, 256], strides = [1, 1]} : vector<32x256xf32> to vector<8x256xf32>
    %130 = vector.extract_strided_slice %128 {offsets = [8, 0], sizes = [8, 256], strides = [1, 1]} : vector<32x256xf32> to vector<8x256xf32>
    %131 = vector.extract_strided_slice %128 {offsets = [16, 0], sizes = [8, 256], strides = [1, 1]} : vector<32x256xf32> to vector<8x256xf32>
    %132 = vector.extract_strided_slice %128 {offsets = [24, 0], sizes = [8, 256], strides = [1, 1]} : vector<32x256xf32> to vector<8x256xf32>
    %133 = arith.negf %129 : vector<8x256xf32>
    %134 = math.exp %133 : vector<8x256xf32>
    %cst_52 = arith.constant 1.000000e+00 : f32
    %135 = vector.broadcast %cst_52 : f32 to vector<8x256xf32>
    %136 = arith.addf %135, %134 : vector<8x256xf32>
    %137 = arith.divf %135, %136 : vector<8x256xf32>
    %138 = arith.negf %130 : vector<8x256xf32>
    %139 = math.exp %138 : vector<8x256xf32>
    %cst_53 = arith.constant 1.000000e+00 : f32
    %140 = vector.broadcast %cst_53 : f32 to vector<8x256xf32>
    %141 = arith.addf %140, %139 : vector<8x256xf32>
    %142 = arith.divf %140, %141 : vector<8x256xf32>
    %143 = arith.negf %131 : vector<8x256xf32>
    %144 = math.exp %143 : vector<8x256xf32>
    %cst_54 = arith.constant 1.000000e+00 : f32
    %145 = vector.broadcast %cst_54 : f32 to vector<8x256xf32>
    %146 = arith.addf %145, %144 : vector<8x256xf32>
    %147 = arith.divf %145, %146 : vector<8x256xf32>
    %148 = math.tanh %132 : vector<8x256xf32>
    %c0_55 = arith.constant 0 : index
    %c0_56 = arith.constant 0 : index
    %c0_57 = arith.constant 0 : index
    %149 = vector.load %arg3[%c0_55, %c0_56, %c0_57] : memref<1x8x256xf32, #tpu.memory_space<vmem>>, vector<1x8x256xf32>
    %150 = vector.shape_cast %149 : vector<1x8x256xf32> to vector<8x256xf32>
    %151 = arith.mulf %142, %150 : vector<8x256xf32>
    %152 = arith.mulf %137, %148 : vector<8x256xf32>
    %153 = arith.addf %151, %152 : vector<8x256xf32>
    %154 = math.tanh %153 : vector<8x256xf32>
    %155 = arith.mulf %147, %154 : vector<8x256xf32>
    %c0_58 = arith.constant 0 : index
    %c0_59 = arith.constant 0 : index
    %c0_60 = arith.constant 0 : index
    %156 = vector.load %arg6[%c0_58, %c0_59, %c0_60] : memref<1x8x256xf32, #tpu.memory_space<vmem>>, vector<1x8x256xf32>
    %157 = vector.shape_cast %156 : vector<1x8x256xf32> to vector<8x256xf32>
    %158 = vector.shape_cast %155 : vector<8x256xf32> to vector<1x8x256xf32>
    tpu.vector_store %arg6[%c0_58, %c0_59, %c0_60], %158 {strides = array<i32>} : memref<1x8x256xf32, #tpu.memory_space<vmem>>, vector<1x8x256xf32>,
    %c0_61 = arith.constant 0 : index
    %c0_62 = arith.constant 0 : index
    %c0_63 = arith.constant 0 : index
    %159 = vector.load %arg7[%c0_61, %c0_62, %c0_63] : memref<1x8x256xf32, #tpu.memory_space<vmem>>, vector<1x8x256xf32>
    %160 = vector.shape_cast %159 : vector<1x8x256xf32> to vector<8x256xf32>
    %161 = vector.shape_cast %153 : vector<8x256xf32> to vector<1x8x256xf32>
    tpu.vector_store %arg7[%c0_61, %c0_62, %c0_63], %161 {strides = array<i32>} : memref<1x8x256xf32, #tpu.memory_space<vmem>>, vector<1x8x256xf32>,
    return
  }
  func.func @transform_0(%arg0: i32) -> (i32, i32, i32) {
    %c0_i32 = arith.constant 0 : i32
    %c0_i32_0 = arith.constant 0 : i32
    %c0_i32_1 = arith.constant 0 : i32
    return %arg0, %c0_i32, %c0_i32_0 : i32, i32, i32
  }
  func.func @transform_1(%arg0: i32) -> (i32, i32, i32) {
    %c0_i32 = arith.constant 0 : i32
    %c0_i32_0 = arith.constant 0 : i32
    %c0_i32_1 = arith.constant 0 : i32
    return %arg0, %c0_i32, %c0_i32_0 : i32, i32, i32
  }
  func.func @transform_2(%arg0: i32) -> (i32, i32, i32) {
    %c0_i32 = arith.constant 0 : i32
    %c0_i32_0 = arith.constant 0 : i32
    %c0_i32_1 = arith.constant 0 : i32
    return %arg0, %c0_i32, %c0_i32_0 : i32, i32, i32
  }
  func.func @transform_3(%arg0: i32) -> (i32, i32) {
    %c0_i32 = arith.constant 0 : i32
    %c0_i32_0 = arith.constant 0 : i32
    %c0_i32_1 = arith.constant 0 : i32
    return %c0_i32, %c0_i32_0 : i32, i32
  }
  func.func @transform_4(%arg0: i32) -> (i32, i32) {
    %c0_i32 = arith.constant 0 : i32
    %c0_i32_0 = arith.constant 0 : i32
    %c0_i32_1 = arith.constant 0 : i32
    return %c0_i32, %c0_i32_0 : i32, i32
  }
  func.func @transform_5(%arg0: i32) -> (i32, i32, i32) {
    %c0_i32 = arith.constant 0 : i32
    %c0_i32_0 = arith.constant 0 : i32
    %c0_i32_1 = arith.constant 0 : i32
    return %arg0, %c0_i32, %c0_i32_0 : i32, i32, i32
  }
  func.func @transform_6(%arg0: i32) -> (i32, i32, i32) {
    %c0_i32 = arith.constant 0 : i32
    %c0_i32_0 = arith.constant 0 : i32
    %c0_i32_1 = arith.constant 0 : i32
    return %arg0, %c0_i32, %c0_i32_0 : i32, i32, i32
  }
}

</mosaic_0001>

<llo_original>
// kernel: tpu_custom_call.1
$region0: #{tpu_custom_call.1}
  #allocation0 [shape = 'u32[]', space=smem, size = 0x4, offset = 0x4, fixed_abs, tag = 'smem constant byte address 0x4 - core index']
  #allocation1 [shape = 'u32[144,128]{1,0:T(1,128)}', space=vmem, size = 0x12000, scoped, tag = 'internal scratch']
  #allocation2 [shape = 'f32[144,256]{1,0:T(8,128)}', space=vmem, size = 0x24000, scoped, tag = 'scratch operand']
  %s0 = inlined_call_operand.hbm [shape: f32[2,8,290], index: 0, kind: input, shape index: {}]
  %s1 = inlined_call_operand.hbm [shape: f32[2,8,290], index: 1, kind: input, shape index: {}]
  %s2 = inlined_call_operand.vmem [shape: f32[2,8,256], index: 2, kind: input, shape index: {}]
  %s3 = inlined_call_operand.hbm [shape: f32[32,144], index: 3, kind: input, shape index: {}]
  %s4 = inlined_call_operand.vmem [shape: f32[32,1], index: 4, kind: input, shape index: {}]
  %s5 = inlined_call_operand.hbm [shape: f32[2,8,256], index: 5, kind: output, shape index: {0}]
  %s6 = inlined_call_operand.hbm [shape: f32[2,8,256], index: 6, kind: output, shape index: {1}]
  %7 = xla_tuple %s5, %s6
  %s8 = sld [smem:[#allocation0]]
  $region73: #{tpu_custom_call.1} parent=0
    _
  %s10 = ssub.s32 1, %s8
  %s11 = scalar_select 0, %s10, %s8
  $region1: #{tpu_custom_call.1} parent=0
    #allocation3 [shape = 'u8[24576]{0}', space=vmem, size = 0x6000, scoped, tag = 'input window, operand 0']
    #allocation4 [shape = 's32[2]{0}', space=sflag, size = 0x8, scoped, tag = 'scoped memory for tpu_custom_call.1']
    #allocation5 [shape = 's32[2]{0}', space=sflag, size = 0x8, scoped, tag = 'scoped memory for tpu_custom_call.1']
    #allocation6 [shape = 'u8[24576]{0}', space=vmem, size = 0x6000, scoped, tag = 'input window, operand 1']
    #allocation7 [shape = 's32[2]{0}', space=sflag, size = 0x8, scoped, tag = 'scoped memory for tpu_custom_call.1']
    #allocation8 [shape = 'u8[32768]{0}', space=vmem, size = 0x8000, scoped, tag = 'input window, operand 3, single buffered']
    #allocation9 [shape = 'u8[16384]{0}', space=vmem, size = 0x4000, scoped, tag = 'output window, operand 0']
    #allocation10 [shape = 'u8[16384]{0}', space=vmem, size = 0x4000, scoped, tag = 'output window, operand 1']
    #allocation11 [shape = 's32[2]{0}', space=sflag, size = 0x8, scoped, tag = 'scoped memory for tpu_custom_call.1']
    %12 = vsyncpa [#allocation4], 0
    %s13 = scalar_lea.sflag [#allocation4], 1
    %14 = vsyncpa %s13, 0
    %15 = vsyncpa [#allocation7], 0
    %s16 = scalar_lea.sflag [#allocation7], 1
    %17 = vsyncpa %s16, 0
    %18 = vsyncpa [#allocation5], 0
    %s19 = scalar_lea.sflag [#allocation5], 1
    %20 = vsyncpa %s19, 0
    %21 = vsyncpa [#allocation11], 0
    %s22 = scalar_lea.sflag [#allocation11], 1
    %23 = vsyncpa %s22, 0
    loop: start=0, step=1, limit=4
    $region2: #{tpu_custom_call.1} parent=1 // loop_pre_header
      _
    $region3: #{tpu_custom_call.1} parent=1 // loop_header
      %s25 = sphi 0, %s29
      %p26 = scmp.ge.s32.totalorder %s25, 4
      %s35 = sphi 0, %s37
      %s38 = sphi 0, %s35
      %s39 = sphi 0, %s38
      %s55 = sphi 0, %s39
      %s61 = sphi 0, %s63
      %s64 = sphi 0, %s61
      %s65 = sphi 0, %s64
      %s81 = sphi 0, %s65
      %s87 = sphi 0, %s89
      %s90 = sphi 0, %s87
      %s91 = sphi 0, %s90
      %s107 = sphi 0, %s91
      %s111 = sphi 0, %s111
      %s113 = sphi 0, %s111
      %s114 = sphi 0, %s113
      %s128 = sphi 0, %s114
      %s132 = sphi 0, %s132
      %s134 = sphi 0, %s132
      %s135 = sphi 0, %s134
      %s149 = sphi 0, %s135
      %s155 = sphi 0, %s157
      %s158 = sphi 0, %s155
      %s159 = sphi 0, %s158
      %s175 = sphi 0, %s159
      %s181 = sphi 0, %s183
      %s184 = sphi 0, %s181
      %s185 = sphi 0, %s184
      %s201 = sphi 0, %s185
    $region4: #{tpu_custom_call.1} parent=1 // loop_header_branch
      %28 = sbr.rel (%p26) target = $region8
    $region5: #{tpu_custom_call.1} parent=1 // loop_body
      %s30 = ssub.s32 %s25, 1
      %s31 = ssub.s32 %s25, 2
      %s32 = sadd.s32 %s25, 1
      %s33 = ssub.s32 %s25, %s32
      %p34 = scmp.eq.s32.totalorder %s33, 0
      %s36 = sadd.s32 %s35, 1
      %s37 = scalar_select %p34, %s35, %s36
      %p40 = pneg %p34
      %p41 = scmp.eq.s32.totalorder %s25, 1
      %p42 = por %p40, %p41
      %p43 = scmp.ne.s32.totalorder %s35, %s38
      %p44 = scmp.eq.s32.totalorder %s25, 0
      %p45 = por %p43, %p44
      %p46 = scmp.ne.s32.totalorder %s35, %s38
      %p47 = scmp.eq.s32.totalorder %s30, 1
      %p48 = por %p46, %p47
      %p49 = scmp.ne.s32.totalorder %s38, %s39
      %p50 = scmp.eq.s32.totalorder %s30, 0
      %p51 = por %p49, %p50
      %p52 = scmp.ne.s32.totalorder %s38, %s39
      %p53 = scmp.eq.s32.totalorder %s31, 1
      %p54 = por %p52, %p53
      %p56 = scmp.ne.s32.totalorder %s39, %s55
      %p57 = scmp.eq.s32.totalorder %s31, 0
      %p58 = por %p56, %p57
      %s59 = ssub.s32 %s25, %s32
      %p60 = scmp.eq.s32.totalorder %s59, 0
      %s62 = sadd.s32 %s61, 1
      %s63 = scalar_select %p60, %s61, %s62
      %p66 = pneg %p60
      %p67 = scmp.eq.s32.totalorder %s25, 1
      %p68 = por %p66, %p67
      %p69 = scmp.ne.s32.totalorder %s61, %s64
      %p70 = scmp.eq.s32.totalorder %s25, 0
      %p71 = por %p69, %p70
      %p72 = scmp.ne.s32.totalorder %s61, %s64
      %p73 = scmp.eq.s32.totalorder %s30, 1
      %p74 = por %p72, %p73
      %p75 = scmp.ne.s32.totalorder %s64, %s65
      %p76 = scmp.eq.s32.totalorder %s30, 0
      %p77 = por %p75, %p76
      %p78 = scmp.ne.s32.totalorder %s64, %s65
      %p79 = scmp.eq.s32.totalorder %s31, 1
      %p80 = por %p78, %p79
      %p82 = scmp.ne.s32.totalorder %s65, %s81
      %p83 = scmp.eq.s32.totalorder %s31, 0
      %p84 = por %p82, %p83
      %s85 = ssub.s32 %s25, %s32
      %p86 = scmp.eq.s32.totalorder %s85, 0
      %s88 = sadd.s32 %s87, 1
      %s89 = scalar_select %p86, %s87, %s88
      %p92 = pneg %p86
      %p93 = scmp.eq.s32.totalorder %s25, 1
      %p94 = por %p92, %p93
      %p95 = scmp.ne.s32.totalorder %s87, %s90
      %p96 = scmp.eq.s32.totalorder %s25, 0
      %p97 = por %p95, %p96
      %p98 = scmp.ne.s32.totalorder %s87, %s90
      %p99 = scmp.eq.s32.totalorder %s30, 1
      %p100 = por %p98, %p99
      %p101 = scmp.ne.s32.totalorder %s90, %s91
      %p102 = scmp.eq.s32.totalorder %s30, 0
      %p103 = por %p101, %p102
      %p104 = scmp.ne.s32.totalorder %s90, %s91
      %p105 = scmp.eq.s32.totalorder %s31, 1
      %p106 = por %p104, %p105
      %p108 = scmp.ne.s32.totalorder %s91, %s107
      %p109 = scmp.eq.s32.totalorder %s31, 0
      %p110 = por %p108, %p109
      %s112 = sadd.s32 %s111, 1
      %p115 = scmp.eq.s32.totalorder %s25, 1
      %p116 = scmp.ne.s32.totalorder %s111, %s113
      %p117 = scmp.eq.s32.totalorder %s25, 0
      %p118 = por %p116, %p117
      %p119 = scmp.ne.s32.totalorder %s111, %s113
      %p120 = scmp.eq.s32.totalorder %s30, 1
      %p121 = por %p119, %p120
      %p122 = scmp.ne.s32.totalorder %s113, %s114
      %p123 = scmp.eq.s32.totalorder %s30, 0
      %p124 = por %p122, %p123
      %p125 = scmp.ne.s32.totalorder %s113, %s114
      %p126 = scmp.eq.s32.totalorder %s31, 1
      %p127 = por %p125, %p126
      %p129 = scmp.ne.s32.totalorder %s114, %s128
      %p130 = scmp.eq.s32.totalorder %s31, 0
      %p131 = por %p129, %p130
      %s133 = sadd.s32 %s132, 1
      %p136 = scmp.eq.s32.totalorder %s25, 1
      %p137 = scmp.ne.s32.totalorder %s132, %s134
      %p138 = scmp.eq.s32.totalorder %s25, 0
      %p139 = por %p137, %p138
      %p140 = scmp.ne.s32.totalorder %s132, %s134
      %p141 = scmp.eq.s32.totalorder %s30, 1
      %p142 = por %p140, %p141
      %p143 = scmp.ne.s32.totalorder %s134, %s135
      %p144 = scmp.eq.s32.totalorder %s30, 0
      %p145 = por %p143, %p144
      %p146 = scmp.ne.s32.totalorder %s134, %s135
      %p147 = scmp.eq.s32.totalorder %s31, 1
      %p148 = por %p146, %p147
      %p150 = scmp.ne.s32.totalorder %s135, %s149
      %p151 = scmp.eq.s32.totalorder %s31, 0
      %p152 = por %p150, %p151
      %s153 = ssub.s32 %s25, %s32
      %p154 = scmp.eq.s32.totalorder %s153, 0
      %s156 = sadd.s32 %s155, 1
      %s157 = scalar_select %p154, %s155, %s156
      %p160 = pneg %p154
      %p161 = scmp.eq.s32.totalorder %s25, 1
      %p162 = por %p160, %p161
      %p163 = scmp.ne.s32.totalorder %s155, %s158
      %p164 = scmp.eq.s32.totalorder %s25, 0
      %p165 = por %p163, %p164
      %p166 = scmp.ne.s32.totalorder %s155, %s158
      %p167 = scmp.eq.s32.totalorder %s30, 1
      %p168 = por %p166, %p167
      %p169 = scmp.ne.s32.totalorder %s158, %s159
      %p170 = scmp.eq.s32.totalorder %s30, 0
      %p171 = por %p169, %p170
      %p172 = scmp.ne.s32.totalorder %s158, %s159
      %p173 = scmp.eq.s32.totalorder %s31, 1
      %p174 = por %p172, %p173
      %p176 = scmp.ne.s32.totalorder %s159, %s175
      %p177 = scmp.eq.s32.totalorder %s31, 0
      %p178 = por %p176, %p177
      %s179 = ssub.s32 %s25, %s32
      %p180 = scmp.eq.s32.totalorder %s179, 0
      %s182 = sadd.s32 %s181, 1
      %s183 = scalar_select %p180, %s181, %s182
      %p186 = pneg %p180
      %p187 = scmp.eq.s32.totalorder %s25, 1
      %p188 = por %p186, %p187
      %p189 = scmp.ne.s32.totalorder %s181, %s184
      %p190 = scmp.eq.s32.totalorder %s25, 0
      %p191 = por %p189, %p190
      %p192 = scmp.ne.s32.totalorder %s181, %s184
      %p193 = scmp.eq.s32.totalorder %s30, 1
      %p194 = por %p192, %p193
      %p195 = scmp.ne.s32.totalorder %s184, %s185
      %p196 = scmp.eq.s32.totalorder %s30, 0
      %p197 = por %p195, %p196
      %p198 = scmp.ne.s32.totalorder %s184, %s185
      %p199 = scmp.eq.s32.totalorder %s31, 1
      %p200 = por %p198, %p199
      %p202 = scmp.ne.s32.totalorder %s185, %s201
      %p203 = scmp.eq.s32.totalorder %s31, 0
      %p204 = por %p202, %p203
      %p205 = scmp.le.s32.totalorder 1, %s25
      %p206 = scmp.lt.s32.totalorder %s25, 3
      %p207 = pnand %p205, %p206
      %p208 = pneg %p207
      // Predicated region
      $region9: #{tpu_custom_call.1} parent=5 // pred_check
        _
      $region10: #{tpu_custom_call.1} parent=5 // pred_check_branch
        %210 = sbr.rel (%p207) target = $region12
      $region11: #{tpu_custom_call.1} parent=5 // pred_region
        %s211 = ssub.s32 %s25, 1
        // Predicated region
        $region13: #{tpu_custom_call.1} parent=11 // pred_check
          %p212 = pneg %p124
        $region14: #{tpu_custom_call.1} parent=11 // pred_check_branch
          %214 = sbr.rel (%p212) target = $region16
        $region15: #{tpu_custom_call.1} parent=11 // pred_region
          %s216 = ssub.s32 1024, 1024
          %217 = vsyncadd [#allocation7], %s216
          %s218 = sshll.u32 [#allocation8], 4
          %s219 = int_to_ptr.vmem [resolvable:$true] %s218
          %224 = dma.hbm_to_vmem [thread:$0]  %s3, 1024, %s219, [#allocation7], 256, 256, 16
        $region16: #{tpu_custom_call.1} parent=11 // pred_fallthru
          _
        // Predicated region
        $region17: #{tpu_custom_call.1} parent=11 // pred_check
          %p225 = pneg %p145
        $region18: #{tpu_custom_call.1} parent=11 // pred_check_branch
          %227 = sbr.rel (%p225) target = $region20
        $region19: #{tpu_custom_call.1} parent=11 // pred_region
          _
        $region20: #{tpu_custom_call.1} parent=11 // pred_fallthru
          _
      $region12: #{tpu_custom_call.1} parent=5 // pred_fallthru
        _
      %p228 = scmp.lt.s32.totalorder %s25, 2
      // Predicated region
      $region21: #{tpu_custom_call.1} parent=5 // pred_check
        %p229 = pneg %p228
      $region22: #{tpu_custom_call.1} parent=5 // pred_check_branch
        %231 = sbr.rel (%p229) target = $region24
      $region23: #{tpu_custom_call.1} parent=5 // pred_region
        // Predicated region
        $region25: #{tpu_custom_call.1} parent=23 // pred_check
          %p232 = pneg %p45
        $region26: #{tpu_custom_call.1} parent=23 // pred_check_branch
          %234 = sbr.rel (%p232) target = $region28
        $region27: #{tpu_custom_call.1} parent=23 // pred_region
          %s235 = sand.u32 %s35, 1
          %s236 = scalar_lea.sflag [#allocation4], %s235
          %s237 = sand.u32 %s35, 1
          %s238 = smul.addr %s237, 24
          %s239 = scalar_lea.vmem [#allocation3], %s238
          %s241 = ssub.s32 384, 384
          %242 = vsyncadd %s236, %s241
          %s243 = smul.addr %s25, 3
          %s244 = smul.addr %s243, 128
          %s245 = scalar_lea.hbm %s0, %s244
          %s247 = sshll.u32 %s239, 4
          %s248 = int_to_ptr.vmem [resolvable:$true] %s247
          %250 = dma.hbm_to_vmem [thread:$0]  %s245, 384, %s248, %s236
        $region28: #{tpu_custom_call.1} parent=23 // pred_fallthru
          _
        // Predicated region
        $region29: #{tpu_custom_call.1} parent=23 // pred_check
          %p251 = pneg %p71
        $region30: #{tpu_custom_call.1} parent=23 // pred_check_branch
          %253 = sbr.rel (%p251) target = $region32
        $region31: #{tpu_custom_call.1} parent=23 // pred_region
          %s254 = sand.u32 %s25, 1
          %s255 = scalar_lea.sflag [#allocation7], %s254
          %s256 = sand.u32 %s61, 1
          %s257 = smul.addr %s256, 24
          %s258 = scalar_lea.vmem [#allocation6], %s257
          %s260 = ssub.s32 384, 384
          %261 = vsyncadd %s255, %s260
          %s262 = smul.addr %s25, 3
          %s263 = smul.addr %s262, 128
          %s264 = scalar_lea.hbm %s1, %s263
          %s266 = sshll.u32 %s258, 4
          %s267 = int_to_ptr.vmem [resolvable:$true] %s266
          %269 = dma.hbm_to_vmem [thread:$0]  %s264, 384, %s267, %s255
        $region32: #{tpu_custom_call.1} parent=23 // pred_fallthru
          _
        // Predicated region
        $region33: #{tpu_custom_call.1} parent=23 // pred_check
          %p270 = pneg %p97
        $region34: #{tpu_custom_call.1} parent=23 // pred_check_branch
          %272 = sbr.rel (%p270) target = $region36
        $region35: #{tpu_custom_call.1} parent=23 // pred_region
          %p273 = scmp.lt.s32.totalorder %s25, 1
          %s274 = scalar_select %p273, %s25, 1
          %s275 = smul.addr %s274, 2
          %s276 = smul.addr %s275, 8
          %s277 = scalar_lea.vmem %s2, %s276
        $region36: #{tpu_custom_call.1} parent=23 // pred_fallthru
          _
      $region24: #{tpu_custom_call.1} parent=5 // pred_fallthru
        _
      %p278 = scmp.le.s32.totalorder 1, %s25
      %p279 = scmp.lt.s32.totalorder %s25, 3
      %p280 = pnand %p278, %p279
      %p281 = pneg %p280
      // Predicated region
      $region37: #{tpu_custom_call.1} parent=5 // pred_check
        _
      $region38: #{tpu_custom_call.1} parent=5 // pred_check_branch
        %283 = sbr.rel (%p280) target = $region40
      $region39: #{tpu_custom_call.1} parent=5 // pred_region
        %s284 = ssub.s32 %s25, 1
        %s285 = sand.u32 %s38, 1
        %s286 = scalar_lea.sflag [#allocation4], %s285
        %s287 = sand.u32 %s38, 1
        %s288 = smul.addr %s287, 24
        %s289 = scalar_lea.vmem [#allocation3], %s288
        // Predicated region
        $region41: #{tpu_custom_call.1} parent=39 // pred_check
          %p290 = pneg %p51
        $region42: #{tpu_custom_call.1} parent=39 // pred_check_branch
          %292 = sbr.rel (%p290) target = $region44
        $region43: #{tpu_custom_call.1} parent=39 // pred_region
          %293 = dma.done %s286, 384
        $region44: #{tpu_custom_call.1} parent=39 // pred_fallthru
          _
        %s294 = sand.u32 %s30, 1
        %s295 = scalar_lea.sflag [#allocation7], %s294
        %s296 = sand.u32 %s64, 1
        %s297 = smul.addr %s296, 24
        %s298 = scalar_lea.vmem [#allocation6], %s297
        // Predicated region
        $region45: #{tpu_custom_call.1} parent=39 // pred_check
          %p299 = pneg %p77
        $region46: #{tpu_custom_call.1} parent=39 // pred_check_branch
          %301 = sbr.rel (%p299) target = $region48
        $region47: #{tpu_custom_call.1} parent=39 // pred_region
          %302 = dma.done %s295, 384
        $region48: #{tpu_custom_call.1} parent=39 // pred_fallthru
          _
        // Predicated region
        $region49: #{tpu_custom_call.1} parent=39 // pred_check
          %p303 = pneg %p124
        $region50: #{tpu_custom_call.1} parent=39 // pred_check_branch
          %305 = sbr.rel (%p303) target = $region52
        $region51: #{tpu_custom_call.1} parent=39 // pred_region
          %306 = dma.done [#allocation7], 1024
        $region52: #{tpu_custom_call.1} parent=39 // pred_fallthru
          _
        %s307 = sand.u32 %s38, 1
        %s308 = scalar_lea.sflag [#allocation4], %s307
        %s309 = sand.u32 %s38, 1
        %s310 = smul.addr %s309, 24
        %s311 = scalar_lea.vmem [#allocation3], %s310
        %p312 = pneg %p51
        %p313 = pneg %p48
        %s314 = sand.u32 %s30, 1
        %s315 = scalar_lea.sflag [#allocation7], %s314
        %s316 = sand.u32 %s64, 1
        %s317 = smul.addr %s316, 24
        %s318 = scalar_lea.vmem [#allocation6], %s317
        %p319 = pneg %p77
        %p320 = pneg %p74
        %p321 = scmp.lt.s32.totalorder %s30, 1
        %s322 = scalar_select %p321, %s30, 1
        %s323 = smul.addr %s322, 2
        %s324 = smul.addr %s323, 8
        %s325 = scalar_lea.vmem %s2, %s324
        %p326 = pneg %p103
        %p327 = pneg %p100
        %p328 = pneg %p124
        %p329 = pneg %p121
        %p330 = pneg %p145
        %p331 = pneg %p142
        %p332 = pneg %p171
        %p333 = pneg %p168
        %s334 = sand.u32 %s158, 1
        %s335 = scalar_lea.sflag [#allocation5], %s334
        %s336 = sand.u32 %s158, 1
        %s337 = smul.addr %s336, 16
        %s338 = scalar_lea.vmem [#allocation9], %s337
        %p339 = pneg %p197
        %p340 = pneg %p194
        %s341 = sand.u32 %s184, 1
        %s342 = scalar_lea.sflag [#allocation11], %s341
        %s343 = sand.u32 %s184, 1
        %s344 = smul.addr %s343, 16
        %s345 = scalar_lea.vmem [#allocation10], %s344
        %p346 = scmp.lt.s32.totalorder %s30, 1
        %s347 = scalar_select %p346, %s30, 1
        %s348 = smul.addr %s347, 2
        %s349 = smul.addr %s348, 8
        %s350 = scalar_lea.vmem %s2, %s349
        %v351 = vld [vmem:[%s289] sm:$0xff]
        %v352 = vld [vmem:[%s289 + $0x8] sm:$0xff]
        %v353 = vld [vmem:[%s289 + $0x10] sm:$0xff]
        %v354 = vld [vmem:[%s298] sm:$0xff]
        %v355 = vld [vmem:[%s298 + $0x8] sm:$0xff]
        %v356 = vld [vmem:[%s298 + $0x10] sm:$0xff]
        %v357 = vlaneseq
        %v358 = vand.u32 %v357, 127
        %v359 = vadd.s32 %v358, 128
        %vm360 = vcmp.lt.s32.totalorder %v358, 0
        %v361 = vsub.s32 0, %v358
        %v362 = vsel %vm360, %v361, %v358
        %v363 = vshrl.u32 %v362, 4
        %v364 = vand.u32 %v362, 15
        %v365 = vsub.s32 0, %v364
        %v366 = vsel %vm360, %v365, %v364
        %vm367 = vcmp.lt.s32.totalorder %v359, 0
        %v368 = vsub.s32 0, %v359
        %v369 = vsel %vm367, %v368, %v359
        %v370 = vshrl.u32 %v369, 4
        %v371 = vand.u32 %v369, 15
        %v372 = vsub.s32 0, %v371
        %v373 = vsel %vm367, %v372, %v371
        %vm374 = vcmp.ne.s32.totalorder %v366, 0
        %vm375 = vcmp.ne.s32.totalorder %v373, 0
        %vm376 = vcmp.lt.s32.totalorder %v366, 0
        %vm377 = vcmp.lt.s32.totalorder %v373, 0
        %vm378 = vmand %vm376, %vm374
        %vm379 = vmand %vm377, %vm375
        %v380 = vadd.s32 %v366, 16
        %v381 = vadd.s32 %v373, 16
        %v382 = vsel %vm378, %v380, %v366
        %v383 = vsel %vm379, %v381, %v373
        %v384 = vadd.s32 %v382, 4294967295
        %v385 = vadd.s32 %v383, 4294967295
        %vm386 = vcmp.ge.s32.totalorder %v384, 0
        %vm387 = vcmp.ge.s32.totalorder %v385, 0
        %vm388 = vcmp.lt.s32.totalorder %v384, 16
        %vm389 = vcmp.lt.s32.totalorder %v385, 16
        %vm390 = vmand %vm386, %vm388
        %vm391 = vmand %vm387, %vm389
        %v392 = vadd.s32 %v382, 1
        %v393 = vadd.s32 %v383, 1
        %vm394 = vcmp.ge.s32.totalorder %v392, 0
        %vm395 = vcmp.ge.s32.totalorder %v393, 0
        %vm396 = vcmp.lt.s32.totalorder %v392, 16
        %vm397 = vcmp.lt.s32.totalorder %v393, 16
        %vm398 = vmand %vm394, %vm396
        %vm399 = vmand %vm395, %vm397
        %v400 = vsel %vm390, 1, 0
        %v401 = vsel %vm391, 1, 0
        %vm402 = vcmp.eq.s32.totalorder %v400, 1
        %vm403 = vcmp.eq.s32.totalorder %v401, 1
        %v404 = vsel %vm402, %v351, 0.0
        %v405 = vsel %vm403, %v352, 0.0
        %v406 = vsel %vm402, %v354, 0.0
        %v407 = vsel %vm403, %v355, 0.0
        %408 = vst [vmem:[#allocation2] sm:$0xff] %v404
        %409 = vst [vmem:[#allocation2 + $0x8] sm:$0xff] %v405
        %410 = vst [vmem:[#allocation2 + $0x10] sm:$0xff] %v406
        %411 = vst [vmem:[#allocation2 + $0x18] sm:$0xff] %v407
        %415 = vrot.lane.b32.xlu0 %v351, 127
        %v416 = vpop.permute.xlu0 %415
        %417 = vrot.lane.b32.xlu0 %v352, 127
        %v418 = vpop.permute.xlu0 %417
        %419 = vrot.lane.b32.xlu0 %v353, 127
        %v420 = vpop.permute.xlu0 %419
        %vm421 = vcmask 1039360
        %v422 = vsel %vm421, %v416, %v418
        %v423 = vsel %vm421, %v418, %v420
        %426 = vst [vmem:[#allocation2 + $0x20] sm:$0xff] %v422
        %427 = vst [vmem:[#allocation2 + $0x28] sm:$0xff] %v423
        %431 = vrot.lane.b32.xlu0 %v354, 127
        %v432 = vpop.permute.xlu0 %431
        %433 = vrot.lane.b32.xlu0 %v355, 127
        %v434 = vpop.permute.xlu0 %433
        %435 = vrot.lane.b32.xlu0 %v356, 127
        %v436 = vpop.permute.xlu0 %435
        %v437 = vsel %vm421, %v432, %v434
        %v438 = vsel %vm421, %v434, %v436
        %441 = vst [vmem:[#allocation2 + $0x30] sm:$0xff] %v437
        %442 = vst [vmem:[#allocation2 + $0x38] sm:$0xff] %v438
        %v443 = vsel %vm398, 1, 0
        %v444 = vsel %vm399, 1, 0
        %vm445 = vcmp.eq.s32.totalorder %v443, 1
        %vm446 = vcmp.eq.s32.totalorder %v444, 1
        %447 = vrot.lane.b32.xlu0 %v351, 126
        %v448 = vpop.permute.xlu0 %447
        %449 = vrot.lane.b32.xlu0 %v352, 126
        %v450 = vpop.permute.xlu0 %449
        %451 = vrot.lane.b32.xlu0 %v353, 126
        %v452 = vpop.permute.xlu0 %451
        %vm453 = vcmask 1031168
        %v454 = vsel %vm453, %v448, %v450
        %v455 = vsel %vm453, %v450, %v452
        %v458 = vsel %vm445, %v454, 0.0
        %v459 = vsel %vm446, %v455, 0.0
        %460 = vrot.lane.b32.xlu0 %v354, 126
        %v461 = vpop.permute.xlu0 %460
        %462 = vrot.lane.b32.xlu0 %v355, 126
        %v463 = vpop.permute.xlu0 %462
        %464 = vrot.lane.b32.xlu0 %v356, 126
        %v465 = vpop.permute.xlu0 %464
        %v466 = vsel %vm453, %v461, %v463
        %v467 = vsel %vm453, %v463, %v465
        %v470 = vsel %vm445, %v466, 0.0
        %v471 = vsel %vm446, %v467, 0.0
        %472 = vst [vmem:[#allocation2 + $0x40] sm:$0xff] %v458
        %473 = vst [vmem:[#allocation2 + $0x48] sm:$0xff] %v459
        %474 = vst [vmem:[#allocation2 + $0x50] sm:$0xff] %v470
        %475 = vst [vmem:[#allocation2 + $0x58] sm:$0xff] %v471
        %476 = vrot.lane.b32.xlu0 %v351, 112
        %v477 = vpop.permute.xlu0 %476
        %478 = vrot.lane.b32.xlu0 %v352, 112
        %v479 = vpop.permute.xlu0 %478
        %480 = vrot.lane.b32.xlu0 %v353, 112
        %v481 = vpop.permute.xlu0 %480
        %vm482 = vcmask 916480
        %v483 = vsel %vm482, %v477, %v479
        %v484 = vsel %vm482, %v479, %v481
        %v487 = vsel %vm402, %v483, 0.0
        %v488 = vsel %vm403, %v484, 0.0
        %489 = vrot.lane.b32.xlu0 %v354, 112
        %v490 = vpop.permute.xlu0 %489
        %491 = vrot.lane.b32.xlu0 %v355, 112
        %v492 = vpop.permute.xlu0 %491
        %493 = vrot.lane.b32.xlu0 %v356, 112
        %v494 = vpop.permute.xlu0 %493
        %v495 = vsel %vm482, %v490, %v492
        %v496 = vsel %vm482, %v492, %v494
        %v499 = vsel %vm402, %v495, 0.0
        %v500 = vsel %vm403, %v496, 0.0
        %501 = vst [vmem:[#allocation2 + $0x60] sm:$0xff] %v487
        %502 = vst [vmem:[#allocation2 + $0x68] sm:$0xff] %v488
        %503 = vst [vmem:[#allocation2 + $0x70] sm:$0xff] %v499
        %504 = vst [vmem:[#allocation2 + $0x78] sm:$0xff] %v500
        %505 = vrot.lane.b32.xlu0 %v351, 111
        %v506 = vpop.permute.xlu0 %505
        %507 = vrot.lane.b32.xlu0 %v352, 111
        %v508 = vpop.permute.xlu0 %507
        %509 = vrot.lane.b32.xlu0 %v353, 111
        %v510 = vpop.permute.xlu0 %509
        %vm511 = vcmask 908288
        %v512 = vsel %vm511, %v506, %v508
        %v513 = vsel %vm511, %v508, %v510
        %516 = vst [vmem:[#allocation2 + $0x80] sm:$0xff] %v512
        %517 = vst [vmem:[#allocation2 + $0x88] sm:$0xff] %v513
        %518 = vrot.lane.b32.xlu0 %v354, 111
        %v519 = vpop.permute.xlu0 %518
        %520 = vrot.lane.b32.xlu0 %v355, 111
        %v521 = vpop.permute.xlu0 %520
        %522 = vrot.lane.b32.xlu0 %v356, 111
        %v523 = vpop.permute.xlu0 %522
        %v524 = vsel %vm511, %v519, %v521
        %v525 = vsel %vm511, %v521, %v523
        %528 = vst [vmem:[#allocation2 + $0x90] sm:$0xff] %v524
        %529 = vst [vmem:[#allocation2 + $0x98] sm:$0xff] %v525
        %530 = vrot.lane.b32.xlu0 %v351, 110
        %v531 = vpop.permute.xlu0 %530
        %532 = vrot.lane.b32.xlu0 %v352, 110
        %v533 = vpop.permute.xlu0 %532
        %534 = vrot.lane.b32.xlu0 %v353, 110
        %v535 = vpop.permute.xlu0 %534
        %vm536 = vcmask 900096
        %v537 = vsel %vm536, %v531, %v533
        %v538 = vsel %vm536, %v533, %v535
        %v541 = vsel %vm445, %v537, 0.0
        %v542 = vsel %vm446, %v538, 0.0
        %543 = vrot.lane.b32.xlu0 %v354, 110
        %v544 = vpop.permute.xlu0 %543
        %545 = vrot.lane.b32.xlu0 %v355, 110
        %v546 = vpop.permute.xlu0 %545
        %547 = vrot.lane.b32.xlu0 %v356, 110
        %v548 = vpop.permute.xlu0 %547
        %v549 = vsel %vm536, %v544, %v546
        %v550 = vsel %vm536, %v546, %v548
        %v553 = vsel %vm445, %v549, 0.0
        %v554 = vsel %vm446, %v550, 0.0
        %555 = vst [vmem:[#allocation2 + $0xa0] sm:$0xff] %v541
        %556 = vst [vmem:[#allocation2 + $0xa8] sm:$0xff] %v542
        %557 = vst [vmem:[#allocation2 + $0xb0] sm:$0xff] %v553
        %558 = vst [vmem:[#allocation2 + $0xb8] sm:$0xff] %v554
        %559 = vrot.lane.b32.xlu0 %v351, 96
        %v560 = vpop.permute.xlu0 %559
        %561 = vrot.lane.b32.xlu0 %v352, 96
        %v562 = vpop.permute.xlu0 %561
        %563 = vrot.lane.b32.xlu0 %v353, 96
        %v564 = vpop.permute.xlu0 %563
        %vm565 = vcmask 785408
        %v566 = vsel %vm565, %v560, %v562
        %v567 = vsel %vm565, %v562, %v564
        %v570 = vsel %vm402, %v566, 0.0
        %v571 = vsel %vm403, %v567, 0.0
        %572 = vrot.lane.b32.xlu0 %v354, 96
        %v573 = vpop.permute.xlu0 %572
        %574 = vrot.lane.b32.xlu0 %v355, 96
        %v575 = vpop.permute.xlu0 %574
        %576 = vrot.lane.b32.xlu0 %v356, 96
        %v577 = vpop.permute.xlu0 %576
        %v578 = vsel %vm565, %v573, %v575
        %v579 = vsel %vm565, %v575, %v577
        %v582 = vsel %vm402, %v578, 0.0
        %v583 = vsel %vm403, %v579, 0.0
        %584 = vst [vmem:[#allocation2 + $0xc0] sm:$0xff] %v570
        %585 = vst [vmem:[#allocation2 + $0xc8] sm:$0xff] %v571
        %586 = vst [vmem:[#allocation2 + $0xd0] sm:$0xff] %v582
        %587 = vst [vmem:[#allocation2 + $0xd8] sm:$0xff] %v583
        %588 = vrot.lane.b32.xlu0 %v351, 95
        %v589 = vpop.permute.xlu0 %588
        %590 = vrot.lane.b32.xlu0 %v352, 95
        %v591 = vpop.permute.xlu0 %590
        %592 = vrot.lane.b32.xlu0 %v353, 95
        %v593 = vpop.permute.xlu0 %592
        %vm594 = vcmask 777216
        %v595 = vsel %vm594, %v589, %v591
        %v596 = vsel %vm594, %v591, %v593
        %599 = vst [vmem:[#allocation2 + $0xe0] sm:$0xff] %v595
        %600 = vst [vmem:[#allocation2 + $0xe8] sm:$0xff] %v596
        %601 = vrot.lane.b32.xlu0 %v354, 95
        %v602 = vpop.permute.xlu0 %601
        %603 = vrot.lane.b32.xlu0 %v355, 95
        %v604 = vpop.permute.xlu0 %603
        %605 = vrot.lane.b32.xlu0 %v356, 95
        %v606 = vpop.permute.xlu0 %605
        %v607 = vsel %vm594, %v602, %v604
        %v608 = vsel %vm594, %v604, %v606
        %611 = vst [vmem:[#allocation2 + $0xf0] sm:$0xff] %v607
        %612 = vst [vmem:[#allocation2 + $0xf8] sm:$0xff] %v608
        %613 = vrot.lane.b32.xlu0 %v351, 94
        %v614 = vpop.permute.xlu0 %613
        %615 = vrot.lane.b32.xlu0 %v352, 94
        %v616 = vpop.permute.xlu0 %615
        %617 = vrot.lane.b32.xlu0 %v353, 94
        %v618 = vpop.permute.xlu0 %617
        %vm619 = vcmask 769024
        %v620 = vsel %vm619, %v614, %v616
        %v621 = vsel %vm619, %v616, %v618
        %v624 = vsel %vm445, %v620, 0.0
        %v625 = vsel %vm446, %v621, 0.0
        %626 = vrot.lane.b32.xlu0 %v354, 94
        %v627 = vpop.permute.xlu0 %626
        %628 = vrot.lane.b32.xlu0 %v355, 94
        %v629 = vpop.permute.xlu0 %628
        %630 = vrot.lane.b32.xlu0 %v356, 94
        %v631 = vpop.permute.xlu0 %630
        %v632 = vsel %vm619, %v627, %v629
        %v633 = vsel %vm619, %v629, %v631
        %v636 = vsel %vm445, %v632, 0.0
        %v637 = vsel %vm446, %v633, 0.0
        %638 = vst [vmem:[#allocation2 + $0x100] sm:$0xff] %v624
        %639 = vst [vmem:[#allocation2 + $0x108] sm:$0xff] %v625
        %640 = vst [vmem:[#allocation2 + $0x110] sm:$0xff] %v636
        %641 = vst [vmem:[#allocation2 + $0x118] sm:$0xff] %v637
        %v642 = vld [vmem:[#allocation8] sm:$0xff]
        %v643 = vld [vmem:[#allocation8 + $0x8] sm:$0xff]
        %v644 = vld [vmem:[#allocation8 + $0x10] sm:$0xff]
        %v645 = vld [vmem:[#allocation8 + $0x18] sm:$0xff]
        %v646 = vld [vmem:[#allocation8 + $0x20] sm:$0xff]
        %v647 = vld [vmem:[#allocation8 + $0x28] sm:$0xff]
        %v648 = vld [vmem:[#allocation8 + $0x30] sm:$0xff]
        %v649 = vld [vmem:[#allocation8 + $0x38] sm:$0xff]
        %v650 = vld [vmem:[#allocation2] sm:$0xff]
        %v651 = vld [vmem:[#allocation2 + $0x8] sm:$0xff]
        %v652 = vld [vmem:[#allocation2 + $0x10] sm:$0xff]
        %v653 = vld [vmem:[#allocation2 + $0x18] sm:$0xff]
        %v654 = vld [vmem:[#allocation2 + $0x20] sm:$0xff]
        %v655 = vld [vmem:[#allocation2 + $0x28] sm:$0xff]
        %v656 = vld [vmem:[#allocation2 + $0x30] sm:$0xff]
        %v657 = vld [vmem:[#allocation2 + $0x38] sm:$0xff]
        %v658 = vld [vmem:[#allocation2 + $0x40] sm:$0xff]
        %v659 = vld [vmem:[#allocation2 + $0x48] sm:$0xff]
        %v660 = vld [vmem:[#allocation2 + $0x50] sm:$0xff]
        %v661 = vld [vmem:[#allocation2 + $0x58] sm:$0xff]
        %v662 = vld [vmem:[#allocation2 + $0x60] sm:$0xff]
        %v663 = vld [vmem:[#allocation2 + $0x68] sm:$0xff]
        %v664 = vld [vmem:[#allocation2 + $0x70] sm:$0xff]
        %v665 = vld [vmem:[#allocation2 + $0x78] sm:$0xff]
        %v666 = vld [vmem:[#allocation2 + $0x80] sm:$0xff]
        %v667 = vld [vmem:[#allocation2 + $0x88] sm:$0xff]
        %v668 = vld [vmem:[#allocation2 + $0x90] sm:$0xff]
        %v669 = vld [vmem:[#allocation2 + $0x98] sm:$0xff]
        %v670 = vld [vmem:[#allocation2 + $0xa0] sm:$0xff]
        %v671 = vld [vmem:[#allocation2 + $0xa8] sm:$0xff]
        %v672 = vld [vmem:[#allocation2 + $0xb0] sm:$0xff]
        %v673 = vld [vmem:[#allocation2 + $0xb8] sm:$0xff]
        %v674 = vld [vmem:[#allocation2 + $0xc0] sm:$0xff]
        %v675 = vld [vmem:[#allocation2 + $0xc8] sm:$0xff]
        %v676 = vld [vmem:[#allocation2 + $0xd0] sm:$0xff]
        %v677 = vld [vmem:[#allocation2 + $0xd8] sm:$0xff]
        %v678 = vld [vmem:[#allocation2 + $0xe0] sm:$0xff]
        %v679 = vld [vmem:[#allocation2 + $0xe8] sm:$0xff]
        %v680 = vld [vmem:[#allocation2 + $0xf0] sm:$0xff]
        %v681 = vld [vmem:[#allocation2 + $0xf8] sm:$0xff]
        %v682 = vld [vmem:[#allocation2 + $0x100] sm:$0xff]
        %v683 = vld [vmem:[#allocation2 + $0x108] sm:$0xff]
        %v684 = vld [vmem:[#allocation2 + $0x110] sm:$0xff]
        %v685 = vld [vmem:[#allocation2 + $0x118] sm:$0xff]
        %v686 = vld [vmem:[%s4] sm:$0xff]
        %v687 = vld [vmem:[%s4 + $0x8] sm:$0xff]
        %v688 = vld [vmem:[%s4 + $0x10] sm:$0xff]
        %v689 = vld [vmem:[%s4 + $0x18] sm:$0xff]
        %691 = vset.pattern.permute.xlu0 0
        %692 = vperm.xlu0 %691, %v686
        %v693 = vpop.permute.xlu0 %692
        %696 = vset.pattern.permute.xlu0 0
        %697 = vperm.xlu0 %696, %v687
        %v698 = vpop.permute.xlu0 %697
        %701 = vset.pattern.permute.xlu0 0
        %702 = vperm.xlu0 %701, %v688
        %v703 = vpop.permute.xlu0 %702
        %706 = vset.pattern.permute.xlu0 0
        %707 = vperm.xlu0 %706, %v689
        %v708 = vpop.permute.xlu0 %707
        %vm710 = vcmask 130048
        %v712 = vsel %vm710, %v643, 0
        %v715 = vsel %vm710, %v645, 0
        %v718 = vsel %vm710, %v647, 0
        %v721 = vsel %vm710, %v649, 0
        %723 = vmatprep.subr.mxu0 %v681
        %724 = vmatpush1.msra.mxu0 %v680
        %725 = vmatprep.subr.mxu0 %v679
        %726 = vmatpush1.msra.mxu0 %v678
        %727 = vmatprep.subr.mxu0 %v677
        %728 = vmatpush1.msra.mxu0 %v676
        %729 = vmatprep.subr.mxu0 %v675
        %730 = vmatpush1.msra.mxu0 %v674
        %731 = vmatprep.subr.mxu0 %v673
        %732 = vmatpush1.msra.mxu0 %v672
        %733 = vmatprep.subr.mxu0 %v671
        %734 = vmatpush1.msra.mxu0 %v670
        %735 = vmatprep.subr.mxu0 %v669
        %736 = vmatpush1.msra.mxu0 %v668
        %737 = vmatprep.subr.mxu0 %v667
        %738 = vmatpush1.msra.mxu0 %v666
        %739 = vmatprep.subr.mxu0 %v665
        %740 = vmatpush1.msra.mxu0 %v664
        %741 = vmatprep.subr.mxu0 %v663
        %742 = vmatpush1.msra.mxu0 %v662
        %743 = vmatprep.subr.mxu0 %v661
        %744 = vmatpush1.msra.mxu0 %v660
        %745 = vmatprep.subr.mxu0 %v659
        %746 = vmatpush1.msra.mxu0 %v658
        %747 = vmatprep.subr.mxu0 %v657
        %748 = vmatpush1.msra.mxu0 %v656
        %749 = vmatprep.subr.mxu0 %v655
        %750 = vmatpush1.msra.mxu0 %v654
        %751 = vmatprep.subr.mxu0 %v653
        %752 = vmatpush1.msra.mxu0 %v652
        %753 = vmatprep.subr.mxu0 %v651
        %754 = vmatpush1.msra.mxu0 %v650
        %755 = vmatprep.subr.mxu0 0.0
        %756 = vmatpush2.msra.mxu0 0.0
        %757 = vmatprep.subr.mxu0 0.0
        %758 = vmatpush2.msra.mxu0 0.0
        %759 = vmatprep.subr.mxu0 0.0
        %760 = vmatpush2.msra.mxu0 0.0
        %761 = vmatprep.subr.mxu0 0.0
        %762 = vmatpush2.msra.mxu0 0.0
        %763 = vmatprep.subr.mxu0 0.0
        %764 = vmatpush2.msra.mxu0 0.0
        %765 = vmatprep.subr.mxu0 0.0
        %766 = vmatpush2.msra.mxu0 0.0
        %767 = vmatprep.subr.mxu0 0.0
        %768 = vmatpush2.msra.mxu0 0.0
        %769 = vmatprep.subr.mxu0 0.0
        %770 = vmatpush2.msra.mxu0 0.0
        %771 = vmatprep.subr.mxu0 0.0
        %772 = vmatpush2.msra.mxu0 0.0
        %773 = vmatprep.subr.mxu0 0.0
        %774 = vmatpush2.msra.mxu0 0.0
        %775 = vmatprep.subr.mxu0 0.0
        %776 = vmatpush2.msra.mxu0 0.0
        %777 = vmatprep.subr.mxu0 0.0
        %778 = vmatpush2.msra.mxu0 0.0
        %779 = vmatprep.subr.mxu0 0.0
        %780 = vmatpush2.msra.mxu0 0.0
        %781 = vmatprep.subr.mxu0 0.0
        %782 = vmatpush2.msra.mxu0 0.0
        %783 = vmatprep.subr.mxu0 %v685
        %784 = vmatpush2.msra.mxu0 %v684
        %785 = vmatprep.subr.mxu0 %v683
        %786 = vmatpush2.msra.mxu0 %v682
        %787 = vmatprep.mubr.f32.mxu0 %v712
        %788 = vmatmul.mubr.f32.gmra.mxu0 %v642
        %v789 = vpop.f32.mrf.mxu0
        %v790 = vadd.f32 %v693, %v789
        %v791 = vpop.f32.mrf.mxu0
        %v792 = vadd.f32 %v693, %v791
        %793 = vmatprep.mubr.f32.mxu0 %v715
        %794 = vmatmul.mubr.f32.gmra.mxu0 %v644
        %v795 = vpop.f32.mrf.mxu0
        %v796 = vadd.f32 %v698, %v795
        %v797 = vpop.f32.mrf.mxu0
        %v798 = vadd.f32 %v698, %v797
        %799 = vmatprep.mubr.f32.mxu0 %v718
        %800 = vmatmul.mubr.f32.gmra.mxu0 %v646
        %v801 = vpop.f32.mrf.mxu0
        %v802 = vadd.f32 %v703, %v801
        %v803 = vpop.f32.mrf.mxu0
        %v804 = vadd.f32 %v703, %v803
        %805 = vmatprep.mubr.f32.mxu0 %v721
        %806 = vmatmul.mubr.f32.gmra.mxu0 %v648
        %v807 = vpop.f32.mrf.mxu0
        %v808 = vadd.f32 %v708, %v807
        %v809 = vpop.f32.mrf.mxu0
        %v810 = vadd.f32 %v708, %v809
        %811 = vdwg.mxu0
        %v812 = vxor.u32 %v790, 2147483648
        %v813 = vxor.u32 %v792, 2147483648
        %v814 = vmul.f32 %v812, 1.442695
        %v815 = vpow.pop %v814
        %v816 = vmul.f32 %v813, 1.442695
        %v817 = vpow.pop %v816
        %v818 = vadd.f32 %v815, 1.0
        %v819 = vadd.f32 %v817, 1.0
        %v820 = vrcp.pop %v818
        %v821 = vmul.f32 1.0, %v820
        %v822 = vrcp.pop %v819
        %v823 = vmul.f32 1.0, %v822
        %v824 = vxor.u32 %v796, 2147483648
        %v825 = vxor.u32 %v798, 2147483648
        %v826 = vmul.f32 %v824, 1.442695
        %v827 = vpow.pop %v826
        %v828 = vmul.f32 %v825, 1.442695
        %v829 = vpow.pop %v828
        %v830 = vadd.f32 %v827, 1.0
        %v831 = vadd.f32 %v829, 1.0
        %v832 = vrcp.pop %v830
        %v833 = vmul.f32 1.0, %v832
        %v834 = vrcp.pop %v831
        %v835 = vmul.f32 1.0, %v834
        %v836 = vxor.u32 %v802, 2147483648
        %v837 = vxor.u32 %v804, 2147483648
        %v838 = vmul.f32 %v836, 1.442695
        %v839 = vpow.pop %v838
        %v840 = vmul.f32 %v837, 1.442695
        %v841 = vpow.pop %v840
        %v842 = vadd.f32 %v839, 1.0
        %v843 = vadd.f32 %v841, 1.0
        %v844 = vrcp.pop %v842
        %v845 = vmul.f32 1.0, %v844
        %v846 = vrcp.pop %v843
        %v847 = vmul.f32 1.0, %v846
        %v848 = vtanh.pop %v808
        %v849 = vtanh.pop %v810
        %v850 = vld [vmem:[%s350] sm:$0xff]
        %v851 = vld [vmem:[%s350 + $0x8] sm:$0xff]
        %v852 = vmul.f32 %v833, %v850
        %v853 = vmul.f32 %v835, %v851
        %v854 = vmul.f32 %v821, %v848
        %v855 = vmul.f32 %v823, %v849
        %v856 = vadd.f32 %v852, %v854
        %v857 = vadd.f32 %v853, %v855
        %v858 = vtanh.pop %v856
        %v859 = vtanh.pop %v857
        %v860 = vmul.f32 %v845, %v858
        %v861 = vmul.f32 %v847, %v859
        %862 = vst [vmem:[%s338] sm:$0xff] %v860
        %863 = vst [vmem:[%s338 + $0x8] sm:$0xff] %v861
        %864 = vst [vmem:[%s345] sm:$0xff] %v856
        %865 = vst [vmem:[%s345 + $0x8] sm:$0xff] %v857
        %s866 = sand.u32 %s158, 1
        %s867 = scalar_lea.sflag [#allocation5], %s866
        %s868 = sand.u32 %s158, 1
        %s869 = smul.addr %s868, 16
        %s870 = scalar_lea.vmem [#allocation9], %s869
        %s871 = sand.u32 %s184, 1
        %s872 = scalar_lea.sflag [#allocation11], %s871
        %s873 = sand.u32 %s184, 1
        %s874 = smul.addr %s873, 16
        %s875 = scalar_lea.vmem [#allocation10], %s874
        // Predicated region
        $region53: #{tpu_custom_call.1} parent=39 // pred_check
          %p876 = pneg %p168
        $region54: #{tpu_custom_call.1} parent=39 // pred_check_branch
          %878 = sbr.rel (%p876) target = $region56
        $region55: #{tpu_custom_call.1} parent=39 // pred_region
          %s880 = ssub.s32 256, 256
          %881 = vsyncadd %s867, %s880
          %s882 = smul.addr %s30, 2
          %s883 = smul.addr %s882, 128
          %s884 = scalar_lea.hbm %s5, %s883
          %s886 = sshll.u32 %s870, 4
          %s887 = int_to_ptr.vmem [resolvable:$true] %s886
          %889 = dma.vmem_to_hbm [thread:$0]  %s887, 256, %s884, %s867
        $region56: #{tpu_custom_call.1} parent=39 // pred_fallthru
          _
        // Predicated region
        $region57: #{tpu_custom_call.1} parent=39 // pred_check
          %p890 = pneg %p194
        $region58: #{tpu_custom_call.1} parent=39 // pred_check_branch
          %892 = sbr.rel (%p890) target = $region60
        $region59: #{tpu_custom_call.1} parent=39 // pred_region
          %s894 = ssub.s32 256, 256
          %895 = vsyncadd %s872, %s894
          %s896 = smul.addr %s30, 2
          %s897 = smul.addr %s896, 128
          %s898 = scalar_lea.hbm %s6, %s897
          %s900 = sshll.u32 %s875, 4
          %s901 = int_to_ptr.vmem [resolvable:$true] %s900
          %903 = dma.vmem_to_hbm [thread:$0]  %s901, 256, %s898, %s872
        $region60: #{tpu_custom_call.1} parent=39 // pred_fallthru
          _
      $region40: #{tpu_custom_call.1} parent=5 // pred_fallthru
        _
      %p904 = scmp.le.s32.totalorder 2, %s25
      // Predicated region
      $region61: #{tpu_custom_call.1} parent=5 // pred_check
        %p905 = pneg %p904
      $region62: #{tpu_custom_call.1} parent=5 // pred_check_branch
        %907 = sbr.rel (%p905) target = $region64
      $region63: #{tpu_custom_call.1} parent=5 // pred_region
        %s908 = ssub.s32 %s25, 2
        // Predicated region
        $region65: #{tpu_custom_call.1} parent=63 // pred_check
          %p909 = pneg %p174
        $region66: #{tpu_custom_call.1} parent=63 // pred_check_branch
          %911 = sbr.rel (%p909) target = $region68
        $region67: #{tpu_custom_call.1} parent=63 // pred_region
          %s912 = sand.u32 %s159, 1
          %s913 = scalar_lea.sflag [#allocation5], %s912
          %s914 = sand.u32 %s159, 1
          %s915 = smul.addr %s914, 16
          %s916 = scalar_lea.vmem [#allocation9], %s915
          %917 = dma.done %s913, 256
        $region68: #{tpu_custom_call.1} parent=63 // pred_fallthru
          _
        // Predicated region
        $region69: #{tpu_custom_call.1} parent=63 // pred_check
          %p918 = pneg %p200
        $region70: #{tpu_custom_call.1} parent=63 // pred_check_branch
          %920 = sbr.rel (%p918) target = $region72
        $region71: #{tpu_custom_call.1} parent=63 // pred_region
          %s921 = sand.u32 %s185, 1
          %s922 = scalar_lea.sflag [#allocation11], %s921
          %s923 = sand.u32 %s185, 1
          %s924 = smul.addr %s923, 16
          %s925 = scalar_lea.vmem [#allocation10], %s924
          %926 = dma.done %s922, 256
        $region72: #{tpu_custom_call.1} parent=63 // pred_fallthru
          _
      $region64: #{tpu_custom_call.1} parent=5 // pred_fallthru
        _
    $region6: #{tpu_custom_call.1} parent=1 // loop_footer
      %s29 = sadd.s32 1, %s25
    $region7: #{tpu_custom_call.1} parent=1 // loop_footer_branch
      %24 = sbr.rel target = $region3
    $region8: #{tpu_custom_call.1} parent=1 // loop_exit
      _
    %927 = vsyncpa [#allocation4], 1
    %s928 = scalar_lea.sflag [#allocation4], 1
    %929 = vsyncpa %s928, 1
    %930 = vsyncpa [#allocation7], 1
    %s931 = scalar_lea.sflag [#allocation7], 1
    %932 = vsyncpa %s931, 1
    %933 = vsyncpa [#allocation5], 1
    %s934 = scalar_lea.sflag [#allocation5], 1
    %935 = vsyncpa %s934, 1
    %936 = vsyncpa [#allocation11], 1
    %s937 = scalar_lea.sflag [#allocation11], 1
    %938 = vsyncpa %s937, 1

</llo_original>
